<compile_context>
chip_gen: v5e
topology: v5e:2x2
jax: 0.10.0
libtpu: 0.0.40
codegen_flags: <defaults>
</compile_context>

<pallas_src>
import jax
import jax.numpy as jnp
from jax.experimental import pallas as pl
from jax.experimental.pallas import tpu as pltpu


_TILE_N = 128  # samples per grid step (lane axis); raise for large batches.


# ----------------------------------------------------------------------------
# Fused kernel:
#   softmax max-prob (confidence) + argmax (prediction) + hits
#   + isotonic predict (clip + piecewise-linear interpolation over SMEM knots)
# ----------------------------------------------------------------------------
def fused_conf_iso_kernel(logits_ref, labels_ref, xk_ref, yk_ref,
                          conf_ref, cali_ref, hits_ref):
    x = logits_ref[...].astype(jnp.float32)                  # (C, T)
    n_cls, t = x.shape
    k = xk_ref.shape[0]

    # --- softmax max prob + first-occurrence argmax (reduce over sublanes) ---
    xmax = jnp.max(x, axis=0, keepdims=True)                  # (1, T)
    ex = jnp.exp(x - xmax)                                    # (C, T)
    denom = jnp.sum(ex, axis=0, keepdims=True)                # (1, T)
    conf = 1.0 / denom                                        # max softmax prob

    cls_iota = jax.lax.broadcasted_iota(jnp.int32, (n_cls, t), 0)
    idx = jnp.where(x == xmax, cls_iota, jnp.int32(n_cls))
    pred = jnp.min(idx, axis=0, keepdims=True)                # (1, T) int32

    conf_ref[...] = conf
    hits_ref[...] = (pred == labels_ref[...]).astype(jnp.int32)

    # --- isotonic predict: out_of_bounds='clip' + linear interpolation -------
    cc = jnp.clip(conf, xk_ref[0], xk_ref[k - 1])             # (1, T)

    x_lo = jnp.full_like(cc, xk_ref[0])
    x_hi = jnp.full_like(cc, xk_ref[1])
    y_lo = jnp.full_like(cc, yk_ref[0])
    y_hi = jnp.full_like(cc, yk_ref[1])
    # Unrolled over K-2 interior knots: scalar-broadcast compares + selects.
    for j in range(1, k - 1):
        xj = xk_ref[j]
        take = cc >= xj
        x_lo = jnp.where(take, xj, x_lo)
        x_hi = jnp.where(take, xk_ref[j + 1], x_hi)
        y_lo = jnp.where(take, yk_ref[j], y_lo)
        y_hi = jnp.where(take, yk_ref[j + 1], y_hi)

    span = x_hi - x_lo
    tfrac = jnp.clip((cc - x_lo) / jnp.maximum(span, 1e-12), 0.0, 1.0)
    cali_ref[...] = y_lo + tfrac * (y_hi - y_lo)              # (1, T)


# ----------------------------------------------------------------------------
# Jitted wrapper (pad + transpose + pallas_call + sort glue in plain JAX)
# ----------------------------------------------------------------------------
@jax.jit
def _iso_eval_impl(logits, labels, x_knots, y_knots):
    n, c = logits.shape
    tile_n = _TILE_N
    n_pad = pl.cdiv(n, tile_n) * tile_n

    # class axis on sublanes, sample axis on lanes (lane-dense).
    logits_t = jnp.transpose(logits.astype(jnp.float32))               # (C, N)
    logits_t = jnp.pad(logits_t, ((0, 0), (0, n_pad - n)))             # (C, Np)
    labels_row = jnp.pad(labels.astype(jnp.int32).reshape(1, n),
                         ((0, 0), (0, n_pad - n)), constant_values=-1)  # (1, Np)

    conf, cali, hits = pl.pallas_call(
        fused_conf_iso_kernel,
        out_shape=(
            jax.ShapeDtypeStruct((1, n_pad), jnp.float32),   # confidences
            jax.ShapeDtypeStruct((1, n_pad), jnp.float32),   # calibrated conf
            jax.ShapeDtypeStruct((1, n_pad), jnp.int32),     # hits
        ),
        grid=(n_pad // tile_n,),
        in_specs=[
            pl.BlockSpec((c, tile_n), lambda i: (0, i)),
            pl.BlockSpec((1, tile_n), lambda i: (0, i)),
            pl.BlockSpec(memory_space=pltpu.MemorySpace.SMEM),   # x_knots (K,)
            pl.BlockSpec(memory_space=pltpu.MemorySpace.SMEM),   # y_knots (K,)
        ],
        out_specs=(
            pl.BlockSpec((1, tile_n), lambda i: (0, i)),
            pl.BlockSpec((1, tile_n), lambda i: (0, i)),
            pl.BlockSpec((1, tile_n), lambda i: (0, i)),
        ),
        compiler_params=pltpu.CompilerParams(
            dimension_semantics=("parallel",)),
    )(logits_t, labels_row, x_knots, y_knots)

    conf = conf[0, :n]
    cali = cali[0, :n]
    hits = hits[0, :n]

    # torch.sort(confidences) ascending + reorder hits.  Monotone calibration
    # map => cali[order] == predict(sorted(conf)) exactly.
    # NOTE: no Pallas TPU sort primitive — done in plain JAX (glue).
    order = jnp.argsort(conf)
    return cali[order], hits[order].astype(jnp.bool_)


def isotonic_regression_eval(logits, labels, x_knots, y_knots):
    cali_sorted, hits_sorted = _iso_eval_impl(logits, labels, x_knots, y_knots)
    # Return the flag outside of jit so it stays a real Python bool.
    return cali_sorted, hits_sorted, True


if __name__ == "__main__":
    key = jax.random.PRNGKey(0)
    k_logits, k_labels = jax.random.split(key)

    N, C, K = 200, 10, 16
    logits = jax.random.normal(k_logits, (N, C), dtype=jnp.float32)
    labels = jax.random.randint(k_labels, (N,), 0, C, dtype=jnp.int32)

    # Deterministic synthetic isotonic "fit": monotone map on [0, 1].
    x_knots = jnp.linspace(0.0, 1.0, K, dtype=jnp.float32)
    y_knots = jnp.sqrt(x_knots).astype(jnp.float32)  # nondecreasing curve

    cali_conf, hits, flag = isotonic_regression_eval(logits, labels, x_knots, y_knots)
    jax.block_until_ready((cali_conf, hits))

    # Reference (plain JAX), same semantics as the PyTorch forward (eval path).
    prob = jax.nn.softmax(logits, axis=1)
    conf_ref = jnp.max(prob, axis=1)
    pred_ref = jnp.argmax(prob, axis=1)
    hits_ref = pred_ref == labels
    order = jnp.argsort(conf_ref)
    conf_ref_s = conf_ref[order]
    hits_ref_s = hits_ref[order]
    cali_ref = jnp.interp(
        jnp.clip(conf_ref_s, x_knots[0], x_knots[-1]), x_knots, y_knots
    )

    assert bool(jnp.all(hits == hits_ref_s))
    assert float(jnp.max(jnp.abs(cali_conf - cali_ref))) < 1e-5
    assert flag is True
    print("KERNEL_OK")
</pallas_src>

<mosaic_0001>
module attributes {stable_mosaic.version = 11 : i64} {
  func.func @fused_conf_iso_kernel(%arg0: i32, %arg1: memref<10x128xf32, #tpu.memory_space<vmem>>, %arg2: memref<1x128xi32, #tpu.memory_space<vmem>>, %arg3: memref<16xf32, #tpu.memory_space<smem>>, %arg4: memref<16xf32, #tpu.memory_space<smem>>, %arg5: memref<1x128xf32, #tpu.memory_space<vmem>>, %arg6: memref<1x128xf32, #tpu.memory_space<vmem>>, %arg7: memref<1x128xi32, #tpu.memory_space<vmem>>) attributes {dimension_semantics = [#tpu.dimension_semantics<parallel>], iteration_bounds = array<i64: 2>, scalar_prefetch = 0 : i64, scratch_operands = 0 : i64, tpu.core_type = #tpu.core_type<tc>, window_params = [{transform_indices = @transform_0, window_bounds = array<i64: 10, 128>}, {transform_indices = @transform_1, window_bounds = array<i64: 1, 128>}, {transform_indices = @transform_2, window_bounds = array<i64: 16>}, {transform_indices = @transform_3, window_bounds = array<i64: 16>}, {transform_indices = @transform_4, window_bounds = array<i64: 1, 128>}, {transform_indices = @transform_5, window_bounds = array<i64: 1, 128>}, {transform_indices = @transform_6, window_bounds = array<i64: 1, 128>}]} {
    %c0 = arith.constant 0 : index
    %c0_0 = arith.constant 0 : index
    %0 = vector.load %arg1[%c0, %c0_0] : memref<10x128xf32, #tpu.memory_space<vmem>>, vector<10x128xf32>
    %cst = arith.constant dense<0xFF800000> : vector<128xf32>
    %1 = vector.multi_reduction <maximumf>, %0, %cst [0] : vector<10x128xf32> to vector<128xf32>
    %2 = vector.shape_cast %1 : vector<128xf32> to vector<1x128xf32>
    %3 = vector.broadcast %2 : vector<1x128xf32> to vector<10x128xf32>
    %4 = arith.subf %0, %3 : vector<10x128xf32>
    %5 = math.exp %4 : vector<10x128xf32>
    %cst_1 = arith.constant dense<0.000000e+00> : vector<128xf32>
    %6 = vector.multi_reduction <add>, %5, %cst_1 [0] : vector<10x128xf32> to vector<128xf32>
    %7 = vector.shape_cast %6 : vector<128xf32> to vector<1x128xf32>
    %cst_2 = arith.constant 1.000000e+00 : f32
    %8 = vector.broadcast %cst_2 : f32 to vector<1x128xf32>
    %9 = arith.divf %8, %7 : vector<1x128xf32>
    %10 = tpu.iota {dimensions = array<i32: 0>} : vector<10x128xi32>
    %11 = vector.broadcast %2 : vector<1x128xf32> to vector<10x128xf32>
    %12 = arith.cmpf oeq, %0, %11 : vector<10x128xf32>
    %c10_i32 = arith.constant 10 : i32
    %13 = vector.broadcast %c10_i32 : i32 to vector<10x128xi32>
    %14 = arith.select %12, %10, %13 : vector<10x128xi1>, vector<10x128xi32>
    %cst_3 = arith.constant dense<2147483647> : vector<128xi32>
    %15 = vector.multi_reduction <minsi>, %14, %cst_3 [0] : vector<10x128xi32> to vector<128xi32>
    %16 = vector.shape_cast %15 : vector<128xi32> to vector<1x128xi32>
    %c0_4 = arith.constant 0 : index
    %c0_5 = arith.constant 0 : index
    %17 = vector.load %arg5[%c0_4, %c0_5] : memref<1x128xf32, #tpu.memory_space<vmem>>, vector<1x128xf32>
    tpu.vector_store %arg5[%c0_4, %c0_5], %9 {strides = array<i32>} : memref<1x128xf32, #tpu.memory_space<vmem>>, vector<1x128xf32>,
    %c0_6 = arith.constant 0 : index
    %c0_7 = arith.constant 0 : index
    %18 = vector.load %arg2[%c0_6, %c0_7] : memref<1x128xi32, #tpu.memory_space<vmem>>, vector<1x128xi32>
    %19 = arith.cmpi eq, %16, %18 : vector<1x128xi32>
    %20 = arith.extui %19 : vector<1x128xi1> to vector<1x128xi32>
    %c0_8 = arith.constant 0 : index
    %c0_9 = arith.constant 0 : index
    %21 = vector.load %arg7[%c0_8, %c0_9] : memref<1x128xi32, #tpu.memory_space<vmem>>, vector<1x128xi32>
    tpu.vector_store %arg7[%c0_8, %c0_9], %20 {strides = array<i32>} : memref<1x128xi32, #tpu.memory_space<vmem>>, vector<1x128xi32>,
    %c0_10 = arith.constant 0 : index
    %22 = memref.load %arg3[%c0_10] : memref<16xf32, #tpu.memory_space<smem>>
    %c15 = arith.constant 15 : index
    %23 = memref.load %arg3[%c15] : memref<16xf32, #tpu.memory_space<smem>>
    %24 = vector.broadcast %22 : f32 to vector<1x128xf32>
    %25 = arith.maximumf %24, %9 : vector<1x128xf32>
    %26 = vector.broadcast %23 : f32 to vector<1x128xf32>
    %27 = arith.minimumf %26, %25 : vector<1x128xf32>
    %c0_11 = arith.constant 0 : index
    %28 = memref.load %arg3[%c0_11] : memref<16xf32, #tpu.memory_space<smem>>
    %29 = vector.broadcast %28 : f32 to vector<1x128xf32>
    %c1 = arith.constant 1 : index
    %30 = memref.load %arg3[%c1] : memref<16xf32, #tpu.memory_space<smem>>
    %31 = vector.broadcast %30 : f32 to vector<1x128xf32>
    %c0_12 = arith.constant 0 : index
    %32 = memref.load %arg4[%c0_12] : memref<16xf32, #tpu.memory_space<smem>>
    %33 = vector.broadcast %32 : f32 to vector<1x128xf32>
    %c1_13 = arith.constant 1 : index
    %34 = memref.load %arg4[%c1_13] : memref<16xf32, #tpu.memory_space<smem>>
    %35 = vector.broadcast %34 : f32 to vector<1x128xf32>
    %c1_14 = arith.constant 1 : index
    %36 = memref.load %arg3[%c1_14] : memref<16xf32, #tpu.memory_space<smem>>
    %37 = vector.broadcast %36 : f32 to vector<1x128xf32>
    %38 = arith.cmpf oge, %27, %37 : vector<1x128xf32>
    %39 = vector.broadcast %36 : f32 to vector<1x128xf32>
    %40 = arith.select %38, %39, %29 : vector<1x128xi1>, vector<1x128xf32>
    %c2 = arith.constant 2 : index
    %41 = memref.load %arg3[%c2] : memref<16xf32, #tpu.memory_space<smem>>
    %42 = vector.broadcast %41 : f32 to vector<1x128xf32>
    %43 = arith.select %38, %42, %31 : vector<1x128xi1>, vector<1x128xf32>
    %c1_15 = arith.constant 1 : index
    %44 = memref.load %arg4[%c1_15] : memref<16xf32, #tpu.memory_space<smem>>
    %45 = vector.broadcast %44 : f32 to vector<1x128xf32>
    %46 = arith.select %38, %45, %33 : vector<1x128xi1>, vector<1x128xf32>
    %c2_16 = arith.constant 2 : index
    %47 = memref.load %arg4[%c2_16] : memref<16xf32, #tpu.memory_space<smem>>
    %48 = vector.broadcast %47 : f32 to vector<1x128xf32>
    %49 = arith.select %38, %48, %35 : vector<1x128xi1>, vector<1x128xf32>
    %c2_17 = arith.constant 2 : index
    %50 = memref.load %arg3[%c2_17] : memref<16xf32, #tpu.memory_space<smem>>
    %51 = vector.broadcast %50 : f32 to vector<1x128xf32>
    %52 = arith.cmpf oge, %27, %51 : vector<1x128xf32>
    %53 = vector.broadcast %50 : f32 to vector<1x128xf32>
    %54 = arith.select %52, %53, %40 : vector<1x128xi1>, vector<1x128xf32>
    %c3 = arith.constant 3 : index
    %55 = memref.load %arg3[%c3] : memref<16xf32, #tpu.memory_space<smem>>
    %56 = vector.broadcast %55 : f32 to vector<1x128xf32>
    %57 = arith.select %52, %56, %43 : vector<1x128xi1>, vector<1x128xf32>
    %c2_18 = arith.constant 2 : index
    %58 = memref.load %arg4[%c2_18] : memref<16xf32, #tpu.memory_space<smem>>
    %59 = vector.broadcast %58 : f32 to vector<1x128xf32>
    %60 = arith.select %52, %59, %46 : vector<1x128xi1>, vector<1x128xf32>
    %c3_19 = arith.constant 3 : index
    %61 = memref.load %arg4[%c3_19] : memref<16xf32, #tpu.memory_space<smem>>
    %62 = vector.broadcast %61 : f32 to vector<1x128xf32>
    %63 = arith.select %52, %62, %49 : vector<1x128xi1>, vector<1x128xf32>
    %c3_20 = arith.constant 3 : index
    %64 = memref.load %arg3[%c3_20] : memref<16xf32, #tpu.memory_space<smem>>
    %65 = vector.broadcast %64 : f32 to vector<1x128xf32>
    %66 = arith.cmpf oge, %27, %65 : vector<1x128xf32>
    %67 = vector.broadcast %64 : f32 to vector<1x128xf32>
    %68 = arith.select %66, %67, %54 : vector<1x128xi1>, vector<1x128xf32>
    %c4 = arith.constant 4 : index
    %69 = memref.load %arg3[%c4] : memref<16xf32, #tpu.memory_space<smem>>
    %70 = vector.broadcast %69 : f32 to vector<1x128xf32>
    %71 = arith.select %66, %70, %57 : vector<1x128xi1>, vector<1x128xf32>
    %c3_21 = arith.constant 3 : index
    %72 = memref.load %arg4[%c3_21] : memref<16xf32, #tpu.memory_space<smem>>
    %73 = vector.broadcast %72 : f32 to vector<1x128xf32>
    %74 = arith.select %66, %73, %60 : vector<1x128xi1>, vector<1x128xf32>
    %c4_22 = arith.constant 4 : index
    %75 = memref.load %arg4[%c4_22] : memref<16xf32, #tpu.memory_space<smem>>
    %76 = vector.broadcast %75 : f32 to vector<1x128xf32>
    %77 = arith.select %66, %76, %63 : vector<1x128xi1>, vector<1x128xf32>
    %c4_23 = arith.constant 4 : index
    %78 = memref.load %arg3[%c4_23] : memref<16xf32, #tpu.memory_space<smem>>
    %79 = vector.broadcast %78 : f32 to vector<1x128xf32>
    %80 = arith.cmpf oge, %27, %79 : vector<1x128xf32>
    %81 = vector.broadcast %78 : f32 to vector<1x128xf32>
    %82 = arith.select %80, %81, %68 : vector<1x128xi1>, vector<1x128xf32>
    %c5 = arith.constant 5 : index
    %83 = memref.load %arg3[%c5] : memref<16xf32, #tpu.memory_space<smem>>
    %84 = vector.broadcast %83 : f32 to vector<1x128xf32>
    %85 = arith.select %80, %84, %71 : vector<1x128xi1>, vector<1x128xf32>
    %c4_24 = arith.constant 4 : index
    %86 = memref.load %arg4[%c4_24] : memref<16xf32, #tpu.memory_space<smem>>
    %87 = vector.broadcast %86 : f32 to vector<1x128xf32>
    %88 = arith.select %80, %87, %74 : vector<1x128xi1>, vector<1x128xf32>
    %c5_25 = arith.constant 5 : index
    %89 = memref.load %arg4[%c5_25] : memref<16xf32, #tpu.memory_space<smem>>
    %90 = vector.broadcast %89 : f32 to vector<1x128xf32>
    %91 = arith.select %80, %90, %77 : vector<1x128xi1>, vector<1x128xf32>
    %c5_26 = arith.constant 5 : index
    %92 = memref.load %arg3[%c5_26] : memref<16xf32, #tpu.memory_space<smem>>
    %93 = vector.broadcast %92 : f32 to vector<1x128xf32>
    %94 = arith.cmpf oge, %27, %93 : vector<1x128xf32>
    %95 = vector.broadcast %92 : f32 to vector<1x128xf32>
    %96 = arith.select %94, %95, %82 : vector<1x128xi1>, vector<1x128xf32>
    %c6 = arith.constant 6 : index
    %97 = memref.load %arg3[%c6] : memref<16xf32, #tpu.memory_space<smem>>
    %98 = vector.broadcast %97 : f32 to vector<1x128xf32>
    %99 = arith.select %94, %98, %85 : vector<1x128xi1>, vector<1x128xf32>
    %c5_27 = arith.constant 5 : index
    %100 = memref.load %arg4[%c5_27] : memref<16xf32, #tpu.memory_space<smem>>
    %101 = vector.broadcast %100 : f32 to vector<1x128xf32>
    %102 = arith.select %94, %101, %88 : vector<1x128xi1>, vector<1x128xf32>
    %c6_28 = arith.constant 6 : index
    %103 = memref.load %arg4[%c6_28] : memref<16xf32, #tpu.memory_space<smem>>
    %104 = vector.broadcast %103 : f32 to vector<1x128xf32>
    %105 = arith.select %94, %104, %91 : vector<1x128xi1>, vector<1x128xf32>
    %c6_29 = arith.constant 6 : index
    %106 = memref.load %arg3[%c6_29] : memref<16xf32, #tpu.memory_space<smem>>
    %107 = vector.broadcast %106 : f32 to vector<1x128xf32>
    %108 = arith.cmpf oge, %27, %107 : vector<1x128xf32>
    %109 = vector.broadcast %106 : f32 to vector<1x128xf32>
    %110 = arith.select %108, %109, %96 : vector<1x128xi1>, vector<1x128xf32>
    %c7 = arith.constant 7 : index
    %111 = memref.load %arg3[%c7] : memref<16xf32, #tpu.memory_space<smem>>
    %112 = vector.broadcast %111 : f32 to vector<1x128xf32>
    %113 = arith.select %108, %112, %99 : vector<1x128xi1>, vector<1x128xf32>
    %c6_30 = arith.constant 6 : index
    %114 = memref.load %arg4[%c6_30] : memref<16xf32, #tpu.memory_space<smem>>
    %115 = vector.broadcast %114 : f32 to vector<1x128xf32>
    %116 = arith.select %108, %115, %102 : vector<1x128xi1>, vector<1x128xf32>
    %c7_31 = arith.constant 7 : index
    %117 = memref.load %arg4[%c7_31] : memref<16xf32, #tpu.memory_space<smem>>
    %118 = vector.broadcast %117 : f32 to vector<1x128xf32>
    %119 = arith.select %108, %118, %105 : vector<1x128xi1>, vector<1x128xf32>
    %c7_32 = arith.constant 7 : index
    %120 = memref.load %arg3[%c7_32] : memref<16xf32, #tpu.memory_space<smem>>
    %121 = vector.broadcast %120 : f32 to vector<1x128xf32>
    %122 = arith.cmpf oge, %27, %121 : vector<1x128xf32>
    %123 = vector.broadcast %120 : f32 to vector<1x128xf32>
    %124 = arith.select %122, %123, %110 : vector<1x128xi1>, vector<1x128xf32>
    %c8 = arith.constant 8 : index
    %125 = memref.load %arg3[%c8] : memref<16xf32, #tpu.memory_space<smem>>
    %126 = vector.broadcast %125 : f32 to vector<1x128xf32>
    %127 = arith.select %122, %126, %113 : vector<1x128xi1>, vector<1x128xf32>
    %c7_33 = arith.constant 7 : index
    %128 = memref.load %arg4[%c7_33] : memref<16xf32, #tpu.memory_space<smem>>
    %129 = vector.broadcast %128 : f32 to vector<1x128xf32>
    %130 = arith.select %122, %129, %116 : vector<1x128xi1>, vector<1x128xf32>
    %c8_34 = arith.constant 8 : index
    %131 = memref.load %arg4[%c8_34] : memref<16xf32, #tpu.memory_space<smem>>
    %132 = vector.broadcast %131 : f32 to vector<1x128xf32>
    %133 = arith.select %122, %132, %119 : vector<1x128xi1>, vector<1x128xf32>
    %c8_35 = arith.constant 8 : index
    %134 = memref.load %arg3[%c8_35] : memref<16xf32, #tpu.memory_space<smem>>
    %135 = vector.broadcast %134 : f32 to vector<1x128xf32>
    %136 = arith.cmpf oge, %27, %135 : vector<1x128xf32>
    %137 = vector.broadcast %134 : f32 to vector<1x128xf32>
    %138 = arith.select %136, %137, %124 : vector<1x128xi1>, vector<1x128xf32>
    %c9 = arith.constant 9 : index
    %139 = memref.load %arg3[%c9] : memref<16xf32, #tpu.memory_space<smem>>
    %140 = vector.broadcast %139 : f32 to vector<1x128xf32>
    %141 = arith.select %136, %140, %127 : vector<1x128xi1>, vector<1x128xf32>
    %c8_36 = arith.constant 8 : index
    %142 = memref.load %arg4[%c8_36] : memref<16xf32, #tpu.memory_space<smem>>
    %143 = vector.broadcast %142 : f32 to vector<1x128xf32>
    %144 = arith.select %136, %143, %130 : vector<1x128xi1>, vector<1x128xf32>
    %c9_37 = arith.constant 9 : index
    %145 = memref.load %arg4[%c9_37] : memref<16xf32, #tpu.memory_space<smem>>
    %146 = vector.broadcast %145 : f32 to vector<1x128xf32>
    %147 = arith.select %136, %146, %133 : vector<1x128xi1>, vector<1x128xf32>
    %c9_38 = arith.constant 9 : index
    %148 = memref.load %arg3[%c9_38] : memref<16xf32, #tpu.memory_space<smem>>
    %149 = vector.broadcast %148 : f32 to vector<1x128xf32>
    %150 = arith.cmpf oge, %27, %149 : vector<1x128xf32>
    %151 = vector.broadcast %148 : f32 to vector<1x128xf32>
    %152 = arith.select %150, %151, %138 : vector<1x128xi1>, vector<1x128xf32>
    %c10 = arith.constant 10 : index
    %153 = memref.load %arg3[%c10] : memref<16xf32, #tpu.memory_space<smem>>
    %154 = vector.broadcast %153 : f32 to vector<1x128xf32>
    %155 = arith.select %150, %154, %141 : vector<1x128xi1>, vector<1x128xf32>
    %c9_39 = arith.constant 9 : index
    %156 = memref.load %arg4[%c9_39] : memref<16xf32, #tpu.memory_space<smem>>
    %157 = vector.broadcast %156 : f32 to vector<1x128xf32>
    %158 = arith.select %150, %157, %144 : vector<1x128xi1>, vector<1x128xf32>
    %c10_40 = arith.constant 10 : index
    %159 = memref.load %arg4[%c10_40] : memref<16xf32, #tpu.memory_space<smem>>
    %160 = vector.broadcast %159 : f32 to vector<1x128xf32>
    %161 = arith.select %150, %160, %147 : vector<1x128xi1>, vector<1x128xf32>
    %c10_41 = arith.constant 10 : index
    %162 = memref.load %arg3[%c10_41] : memref<16xf32, #tpu.memory_space<smem>>
    %163 = vector.broadcast %162 : f32 to vector<1x128xf32>
    %164 = arith.cmpf oge, %27, %163 : vector<1x128xf32>
    %165 = vector.broadcast %162 : f32 to vector<1x128xf32>
    %166 = arith.select %164, %165, %152 : vector<1x128xi1>, vector<1x128xf32>
    %c11 = arith.constant 11 : index
    %167 = memref.load %arg3[%c11] : memref<16xf32, #tpu.memory_space<smem>>
    %168 = vector.broadcast %167 : f32 to vector<1x128xf32>
    %169 = arith.select %164, %168, %155 : vector<1x128xi1>, vector<1x128xf32>
    %c10_42 = arith.constant 10 : index
    %170 = memref.load %arg4[%c10_42] : memref<16xf32, #tpu.memory_space<smem>>
    %171 = vector.broadcast %170 : f32 to vector<1x128xf32>
    %172 = arith.select %164, %171, %158 : vector<1x128xi1>, vector<1x128xf32>
    %c11_43 = arith.constant 11 : index
    %173 = memref.load %arg4[%c11_43] : memref<16xf32, #tpu.memory_space<smem>>
    %174 = vector.broadcast %173 : f32 to vector<1x128xf32>
    %175 = arith.select %164, %174, %161 : vector<1x128xi1>, vector<1x128xf32>
    %c11_44 = arith.constant 11 : index
    %176 = memref.load %arg3[%c11_44] : memref<16xf32, #tpu.memory_space<smem>>
    %177 = vector.broadcast %176 : f32 to vector<1x128xf32>
    %178 = arith.cmpf oge, %27, %177 : vector<1x128xf32>
    %179 = vector.broadcast %176 : f32 to vector<1x128xf32>
    %180 = arith.select %178, %179, %166 : vector<1x128xi1>, vector<1x128xf32>
    %c12 = arith.constant 12 : index
    %181 = memref.load %arg3[%c12] : memref<16xf32, #tpu.memory_space<smem>>
    %182 = vector.broadcast %181 : f32 to vector<1x128xf32>
    %183 = arith.select %178, %182, %169 : vector<1x128xi1>, vector<1x128xf32>
    %c11_45 = arith.constant 11 : index
    %184 = memref.load %arg4[%c11_45] : memref<16xf32, #tpu.memory_space<smem>>
    %185 = vector.broadcast %184 : f32 to vector<1x128xf32>
    %186 = arith.select %178, %185, %172 : vector<1x128xi1>, vector<1x128xf32>
    %c12_46 = arith.constant 12 : index
    %187 = memref.load %arg4[%c12_46] : memref<16xf32, #tpu.memory_space<smem>>
    %188 = vector.broadcast %187 : f32 to vector<1x128xf32>
    %189 = arith.select %178, %188, %175 : vector<1x128xi1>, vector<1x128xf32>
    %c12_47 = arith.constant 12 : index
    %190 = memref.load %arg3[%c12_47] : memref<16xf32, #tpu.memory_space<smem>>
    %191 = vector.broadcast %190 : f32 to vector<1x128xf32>
    %192 = arith.cmpf oge, %27, %191 : vector<1x128xf32>
    %193 = vector.broadcast %190 : f32 to vector<1x128xf32>
    %194 = arith.select %192, %193, %180 : vector<1x128xi1>, vector<1x128xf32>
    %c13 = arith.constant 13 : index
    %195 = memref.load %arg3[%c13] : memref<16xf32, #tpu.memory_space<smem>>
    %196 = vector.broadcast %195 : f32 to vector<1x128xf32>
    %197 = arith.select %192, %196, %183 : vector<1x128xi1>, vector<1x128xf32>
    %c12_48 = arith.constant 12 : index
    %198 = memref.load %arg4[%c12_48] : memref<16xf32, #tpu.memory_space<smem>>
    %199 = vector.broadcast %198 : f32 to vector<1x128xf32>
    %200 = arith.select %192, %199, %186 : vector<1x128xi1>, vector<1x128xf32>
    %c13_49 = arith.constant 13 : index
    %201 = memref.load %arg4[%c13_49] : memref<16xf32, #tpu.memory_space<smem>>
    %202 = vector.broadcast %201 : f32 to vector<1x128xf32>
    %203 = arith.select %192, %202, %189 : vector<1x128xi1>, vector<1x128xf32>
    %c13_50 = arith.constant 13 : index
    %204 = memref.load %arg3[%c13_50] : memref<16xf32, #tpu.memory_space<smem>>
    %205 = vector.broadcast %204 : f32 to vector<1x128xf32>
    %206 = arith.cmpf oge, %27, %205 : vector<1x128xf32>
    %207 = vector.broadcast %204 : f32 to vector<1x128xf32>
    %208 = arith.select %206, %207, %194 : vector<1x128xi1>, vector<1x128xf32>
    %c14 = arith.constant 14 : index
    %209 = memref.load %arg3[%c14] : memref<16xf32, #tpu.memory_space<smem>>
    %210 = vector.broadcast %209 : f32 to vector<1x128xf32>
    %211 = arith.select %206, %210, %197 : vector<1x128xi1>, vector<1x128xf32>
    %c13_51 = arith.constant 13 : index
    %212 = memref.load %arg4[%c13_51] : memref<16xf32, #tpu.memory_space<smem>>
    %213 = vector.broadcast %212 : f32 to vector<1x128xf32>
    %214 = arith.select %206, %213, %200 : vector<1x128xi1>, vector<1x128xf32>
    %c14_52 = arith.constant 14 : index
    %215 = memref.load %arg4[%c14_52] : memref<16xf32, #tpu.memory_space<smem>>
    %216 = vector.broadcast %215 : f32 to vector<1x128xf32>
    %217 = arith.select %206, %216, %203 : vector<1x128xi1>, vector<1x128xf32>
    %c14_53 = arith.constant 14 : index
    %218 = memref.load %arg3[%c14_53] : memref<16xf32, #tpu.memory_space<smem>>
    %219 = vector.broadcast %218 : f32 to vector<1x128xf32>
    %220 = arith.cmpf oge, %27, %219 : vector<1x128xf32>
    %221 = vector.broadcast %218 : f32 to vector<1x128xf32>
    %222 = arith.select %220, %221, %208 : vector<1x128xi1>, vector<1x128xf32>
    %c15_54 = arith.constant 15 : index
    %223 = memref.load %arg3[%c15_54] : memref<16xf32, #tpu.memory_space<smem>>
    %224 = vector.broadcast %223 : f32 to vector<1x128xf32>
    %225 = arith.select %220, %224, %211 : vector<1x128xi1>, vector<1x128xf32>
    %c14_55 = arith.constant 14 : index
    %226 = memref.load %arg4[%c14_55] : memref<16xf32, #tpu.memory_space<smem>>
    %227 = vector.broadcast %226 : f32 to vector<1x128xf32>
    %228 = arith.select %220, %227, %214 : vector<1x128xi1>, vector<1x128xf32>
    %c15_56 = arith.constant 15 : index
    %229 = memref.load %arg4[%c15_56] : memref<16xf32, #tpu.memory_space<smem>>
    %230 = vector.broadcast %229 : f32 to vector<1x128xf32>
    %231 = arith.select %220, %230, %217 : vector<1x128xi1>, vector<1x128xf32>
    %232 = arith.subf %225, %222 : vector<1x128xf32>
    %233 = arith.subf %27, %222 : vector<1x128xf32>
    %cst_57 = arith.constant 9.99999996E-13 : f32
    %234 = vector.broadcast %cst_57 : f32 to vector<1x128xf32>
    %235 = arith.maximumf %232, %234 : vector<1x128xf32>
    %236 = arith.divf %233, %235 : vector<1x128xf32>
    %cst_58 = arith.constant 0.000000e+00 : f32
    %cst_59 = arith.constant 1.000000e+00 : f32
    %237 = vector.broadcast %cst_58 : f32 to vector<1x128xf32>
    %238 = arith.maximumf %237, %236 : vector<1x128xf32>
    %239 = vector.broadcast %cst_59 : f32 to vector<1x128xf32>
    %240 = arith.minimumf %239, %238 : vector<1x128xf32>
    %241 = arith.subf %231, %228 : vector<1x128xf32>
    %242 = arith.mulf %240, %241 : vector<1x128xf32>
    %243 = arith.addf %228, %242 : vector<1x128xf32>
    %c0_60 = arith.constant 0 : index
    %c0_61 = arith.constant 0 : index
    %244 = vector.load %arg6[%c0_60, %c0_61] : memref<1x128xf32, #tpu.memory_space<vmem>>, vector<1x128xf32>
    tpu.vector_store %arg6[%c0_60, %c0_61], %243 {strides = array<i32>} : memref<1x128xf32, #tpu.memory_space<vmem>>, vector<1x128xf32>,
    return
  }
  func.func @transform_0(%arg0: i32) -> (i32, i32) {
    %c0_i32 = arith.constant 0 : i32
    %c0_i32_0 = arith.constant 0 : i32
    return %c0_i32, %arg0 : i32, i32
  }
  func.func @transform_1(%arg0: i32) -> (i32, i32) {
    %c0_i32 = arith.constant 0 : i32
    %c0_i32_0 = arith.constant 0 : i32
    return %c0_i32, %arg0 : i32, i32
  }
  func.func @transform_2(%arg0: i32) -> i32 {
    %c0_i32 = arith.constant 0 : i32
    %c0_i32_0 = arith.constant 0 : i32
    return %c0_i32 : i32
  }
  func.func @transform_3(%arg0: i32) -> i32 {
    %c0_i32 = arith.constant 0 : i32
    %c0_i32_0 = arith.constant 0 : i32
    return %c0_i32 : i32
  }
  func.func @transform_4(%arg0: i32) -> (i32, i32) {
    %c0_i32 = arith.constant 0 : i32
    %c0_i32_0 = arith.constant 0 : i32
    return %c0_i32, %arg0 : i32, i32
  }
  func.func @transform_5(%arg0: i32) -> (i32, i32) {
    %c0_i32 = arith.constant 0 : i32
    %c0_i32_0 = arith.constant 0 : i32
    return %c0_i32, %arg0 : i32, i32
  }
  func.func @transform_6(%arg0: i32) -> (i32, i32) {
    %c0_i32 = arith.constant 0 : i32
    %c0_i32_0 = arith.constant 0 : i32
    return %c0_i32, %arg0 : i32, i32
  }
}

</mosaic_0001>

<llo_original>
// kernel: _iso_eval_impl.1
$region0: #{_iso_eval_impl.1}
  #allocation0 [shape = 'u32[]', space=smem, size = 0x4, offset = 0x4, fixed_abs, tag = 'smem constant byte address 0x4 - core index']
  #allocation1 [shape = 'u32[72,128]{1,0:T(1,128)}', space=vmem, size = 0x9000, scoped, tag = 'internal scratch']
  %s0 = inlined_call_operand.vmem [shape: f32[10,256], index: 0, kind: input, shape index: {}]
  %s1 = inlined_call_operand.vmem [shape: s32[1,256], index: 1, kind: input, shape index: {}]
  %s2 = inlined_call_operand.vmem [shape: f32[16], index: 2, kind: input, shape index: {}]
  %s3 = inlined_call_operand.vmem [shape: f32[16], index: 3, kind: input, shape index: {}]
  %s4 = inlined_call_operand.vmem [shape: f32[1,256], index: 4, kind: output, shape index: {0}]
  %s5 = inlined_call_operand.vmem [shape: f32[1,256], index: 5, kind: output, shape index: {1}]
  %s6 = inlined_call_operand.vmem [shape: s32[1,256], index: 6, kind: output, shape index: {2}]
  %7 = xla_tuple %s4, %s5, %s6
  %s8 = sld [smem:[#allocation0]]
  $region111: #{_iso_eval_impl.1} parent=0
    _
  %s10 = ssub.s32 1, %s8
  %s11 = scalar_select 0, %s10, %s8
  $region1: #{_iso_eval_impl.1} parent=0
    #allocation2 [shape = 'u8[16384]{0}', space=vmem, size = 0x4000, scoped, tag = 'input window, operand 0']
    #allocation3 [shape = 'u8[512]{0}', space=smem, size = 0x200, scoped, tag = 'input window, operand 2, single buffered']
    #allocation4 [shape = 's32[2]{0}', space=sflag, size = 0x8, scoped, tag = 'scoped memory for _iso_eval_impl.1']
    #allocation5 [shape = 'u8[512]{0}', space=smem, size = 0x200, scoped, tag = 'input window, operand 3, single buffered']
    #allocation6 [shape = 's32[1]{0}', space=sflag, size = 0x4, scoped, tag = 'scoped memory for _iso_eval_impl.1']
    %12 = vsyncpa [#allocation4], 0
    %13 = vsyncpa [#allocation6], 0
    loop: start=0, step=1, limit=4
    $region2: #{_iso_eval_impl.1} parent=1 // loop_pre_header
      _
    $region3: #{_iso_eval_impl.1} parent=1 // loop_header
      %s15 = sphi 0, %s19
      %p16 = scmp.ge.s32.totalorder %s15, 4
      %s25 = sphi 0, %s27
      %s28 = sphi 0, %s25
      %s29 = sphi 0, %s28
      %s45 = sphi 0, %s29
      %s51 = sphi 0, %s53
      %s54 = sphi 0, %s51
      %s55 = sphi 0, %s54
      %s71 = sphi 0, %s55
      %s75 = sphi 0, %s75
      %s77 = sphi 0, %s75
      %s78 = sphi 0, %s77
      %s92 = sphi 0, %s78
      %s96 = sphi 0, %s96
      %s98 = sphi 0, %s96
      %s99 = sphi 0, %s98
      %s113 = sphi 0, %s99
      %s119 = sphi 0, %s121
      %s122 = sphi 0, %s119
      %s123 = sphi 0, %s122
      %s139 = sphi 0, %s123
      %s145 = sphi 0, %s147
      %s148 = sphi 0, %s145
      %s149 = sphi 0, %s148
      %s165 = sphi 0, %s149
      %s171 = sphi 0, %s173
      %s174 = sphi 0, %s171
      %s175 = sphi 0, %s174
      %s191 = sphi 0, %s175
    $region4: #{_iso_eval_impl.1} parent=1 // loop_header_branch
      %18 = sbr.rel (%p16) target = $region8
    $region5: #{_iso_eval_impl.1} parent=1 // loop_body
      %s20 = ssub.s32 %s15, 1
      %s21 = ssub.s32 %s15, 2
      %s22 = sadd.s32 %s15, 1
      %s23 = ssub.s32 %s15, %s22
      %p24 = scmp.eq.s32.totalorder %s23, 0
      %s26 = sadd.s32 %s25, 1
      %s27 = scalar_select %p24, %s25, %s26
      %p30 = pneg %p24
      %p31 = scmp.eq.s32.totalorder %s15, 1
      %p32 = por %p30, %p31
      %p33 = scmp.ne.s32.totalorder %s25, %s28
      %p34 = scmp.eq.s32.totalorder %s15, 0
      %p35 = por %p33, %p34
      %p36 = scmp.ne.s32.totalorder %s25, %s28
      %p37 = scmp.eq.s32.totalorder %s20, 1
      %p38 = por %p36, %p37
      %p39 = scmp.ne.s32.totalorder %s28, %s29
      %p40 = scmp.eq.s32.totalorder %s20, 0
      %p41 = por %p39, %p40
      %p42 = scmp.ne.s32.totalorder %s28, %s29
      %p43 = scmp.eq.s32.totalorder %s21, 1
      %p44 = por %p42, %p43
      %p46 = scmp.ne.s32.totalorder %s29, %s45
      %p47 = scmp.eq.s32.totalorder %s21, 0
      %p48 = por %p46, %p47
      %s49 = ssub.s32 %s15, %s22
      %p50 = scmp.eq.s32.totalorder %s49, 0
      %s52 = sadd.s32 %s51, 1
      %s53 = scalar_select %p50, %s51, %s52
      %p56 = pneg %p50
      %p57 = scmp.eq.s32.totalorder %s15, 1
      %p58 = por %p56, %p57
      %p59 = scmp.ne.s32.totalorder %s51, %s54
      %p60 = scmp.eq.s32.totalorder %s15, 0
      %p61 = por %p59, %p60
      %p62 = scmp.ne.s32.totalorder %s51, %s54
      %p63 = scmp.eq.s32.totalorder %s20, 1
      %p64 = por %p62, %p63
      %p65 = scmp.ne.s32.totalorder %s54, %s55
      %p66 = scmp.eq.s32.totalorder %s20, 0
      %p67 = por %p65, %p66
      %p68 = scmp.ne.s32.totalorder %s54, %s55
      %p69 = scmp.eq.s32.totalorder %s21, 1
      %p70 = por %p68, %p69
      %p72 = scmp.ne.s32.totalorder %s55, %s71
      %p73 = scmp.eq.s32.totalorder %s21, 0
      %p74 = por %p72, %p73
      %s76 = sadd.s32 %s75, 1
      %p79 = scmp.eq.s32.totalorder %s15, 1
      %p80 = scmp.ne.s32.totalorder %s75, %s77
      %p81 = scmp.eq.s32.totalorder %s15, 0
      %p82 = por %p80, %p81
      %p83 = scmp.ne.s32.totalorder %s75, %s77
      %p84 = scmp.eq.s32.totalorder %s20, 1
      %p85 = por %p83, %p84
      %p86 = scmp.ne.s32.totalorder %s77, %s78
      %p87 = scmp.eq.s32.totalorder %s20, 0
      %p88 = por %p86, %p87
      %p89 = scmp.ne.s32.totalorder %s77, %s78
      %p90 = scmp.eq.s32.totalorder %s21, 1
      %p91 = por %p89, %p90
      %p93 = scmp.ne.s32.totalorder %s78, %s92
      %p94 = scmp.eq.s32.totalorder %s21, 0
      %p95 = por %p93, %p94
      %s97 = sadd.s32 %s96, 1
      %p100 = scmp.eq.s32.totalorder %s15, 1
      %p101 = scmp.ne.s32.totalorder %s96, %s98
      %p102 = scmp.eq.s32.totalorder %s15, 0
      %p103 = por %p101, %p102
      %p104 = scmp.ne.s32.totalorder %s96, %s98
      %p105 = scmp.eq.s32.totalorder %s20, 1
      %p106 = por %p104, %p105
      %p107 = scmp.ne.s32.totalorder %s98, %s99
      %p108 = scmp.eq.s32.totalorder %s20, 0
      %p109 = por %p107, %p108
      %p110 = scmp.ne.s32.totalorder %s98, %s99
      %p111 = scmp.eq.s32.totalorder %s21, 1
      %p112 = por %p110, %p111
      %p114 = scmp.ne.s32.totalorder %s99, %s113
      %p115 = scmp.eq.s32.totalorder %s21, 0
      %p116 = por %p114, %p115
      %s117 = ssub.s32 %s15, %s22
      %p118 = scmp.eq.s32.totalorder %s117, 0
      %s120 = sadd.s32 %s119, 1
      %s121 = scalar_select %p118, %s119, %s120
      %p124 = pneg %p118
      %p125 = scmp.eq.s32.totalorder %s15, 1
      %p126 = por %p124, %p125
      %p127 = scmp.ne.s32.totalorder %s119, %s122
      %p128 = scmp.eq.s32.totalorder %s15, 0
      %p129 = por %p127, %p128
      %p130 = scmp.ne.s32.totalorder %s119, %s122
      %p131 = scmp.eq.s32.totalorder %s20, 1
      %p132 = por %p130, %p131
      %p133 = scmp.ne.s32.totalorder %s122, %s123
      %p134 = scmp.eq.s32.totalorder %s20, 0
      %p135 = por %p133, %p134
      %p136 = scmp.ne.s32.totalorder %s122, %s123
      %p137 = scmp.eq.s32.totalorder %s21, 1
      %p138 = por %p136, %p137
      %p140 = scmp.ne.s32.totalorder %s123, %s139
      %p141 = scmp.eq.s32.totalorder %s21, 0
      %p142 = por %p140, %p141
      %s143 = ssub.s32 %s15, %s22
      %p144 = scmp.eq.s32.totalorder %s143, 0
      %s146 = sadd.s32 %s145, 1
      %s147 = scalar_select %p144, %s145, %s146
      %p150 = pneg %p144
      %p151 = scmp.eq.s32.totalorder %s15, 1
      %p152 = por %p150, %p151
      %p153 = scmp.ne.s32.totalorder %s145, %s148
      %p154 = scmp.eq.s32.totalorder %s15, 0
      %p155 = por %p153, %p154
      %p156 = scmp.ne.s32.totalorder %s145, %s148
      %p157 = scmp.eq.s32.totalorder %s20, 1
      %p158 = por %p156, %p157
      %p159 = scmp.ne.s32.totalorder %s148, %s149
      %p160 = scmp.eq.s32.totalorder %s20, 0
      %p161 = por %p159, %p160
      %p162 = scmp.ne.s32.totalorder %s148, %s149
      %p163 = scmp.eq.s32.totalorder %s21, 1
      %p164 = por %p162, %p163
      %p166 = scmp.ne.s32.totalorder %s149, %s165
      %p167 = scmp.eq.s32.totalorder %s21, 0
      %p168 = por %p166, %p167
      %s169 = ssub.s32 %s15, %s22
      %p170 = scmp.eq.s32.totalorder %s169, 0
      %s172 = sadd.s32 %s171, 1
      %s173 = scalar_select %p170, %s171, %s172
      %p176 = pneg %p170
      %p177 = scmp.eq.s32.totalorder %s15, 1
      %p178 = por %p176, %p177
      %p179 = scmp.ne.s32.totalorder %s171, %s174
      %p180 = scmp.eq.s32.totalorder %s15, 0
      %p181 = por %p179, %p180
      %p182 = scmp.ne.s32.totalorder %s171, %s174
      %p183 = scmp.eq.s32.totalorder %s20, 1
      %p184 = por %p182, %p183
      %p185 = scmp.ne.s32.totalorder %s174, %s175
      %p186 = scmp.eq.s32.totalorder %s20, 0
      %p187 = por %p185, %p186
      %p188 = scmp.ne.s32.totalorder %s174, %s175
      %p189 = scmp.eq.s32.totalorder %s21, 1
      %p190 = por %p188, %p189
      %p192 = scmp.ne.s32.totalorder %s175, %s191
      %p193 = scmp.eq.s32.totalorder %s21, 0
      %p194 = por %p192, %p193
      %p195 = scmp.le.s32.totalorder 1, %s15
      %p196 = scmp.lt.s32.totalorder %s15, 3
      %p197 = pnand %p195, %p196
      %p198 = pneg %p197
      // Predicated region
      $region9: #{_iso_eval_impl.1} parent=5 // pred_check
        _
      $region10: #{_iso_eval_impl.1} parent=5 // pred_check_branch
        %200 = sbr.rel (%p197) target = $region12
      $region11: #{_iso_eval_impl.1} parent=5 // pred_region
        %s201 = ssub.s32 %s15, 1
        // Predicated region
        $region13: #{_iso_eval_impl.1} parent=11 // pred_check
          %p202 = pneg %p88
        $region14: #{_iso_eval_impl.1} parent=11 // pred_check_branch
          %204 = sbr.rel (%p202) target = $region16
        $region15: #{_iso_eval_impl.1} parent=11 // pred_region
          %206 = vsyncadd [#allocation4], 0
          %s208 = sshll.u32 %s2, 4
          %s209 = int_to_ptr.vmem [resolvable:$true] %s208
          %211 = dma.vmem_to_smem %s209, 16, [#allocation3], [#allocation4]
        $region16: #{_iso_eval_impl.1} parent=11 // pred_fallthru
          _
        // Predicated region
        $region17: #{_iso_eval_impl.1} parent=11 // pred_check
          %p212 = pneg %p109
        $region18: #{_iso_eval_impl.1} parent=11 // pred_check_branch
          %214 = sbr.rel (%p212) target = $region20
        $region19: #{_iso_eval_impl.1} parent=11 // pred_region
          %216 = vsyncadd [#allocation6], 0
          %s218 = sshll.u32 %s3, 4
          %s219 = int_to_ptr.vmem [resolvable:$true] %s218
          %221 = dma.vmem_to_smem %s219, 16, [#allocation5], [#allocation6]
        $region20: #{_iso_eval_impl.1} parent=11 // pred_fallthru
          _
      $region12: #{_iso_eval_impl.1} parent=5 // pred_fallthru
        _
      %p222 = scmp.lt.s32.totalorder %s15, 2
      // Predicated region
      $region21: #{_iso_eval_impl.1} parent=5 // pred_check
        %p223 = pneg %p222
      $region22: #{_iso_eval_impl.1} parent=5 // pred_check_branch
        %225 = sbr.rel (%p223) target = $region24
      $region23: #{_iso_eval_impl.1} parent=5 // pred_region
        // Predicated region
        $region25: #{_iso_eval_impl.1} parent=23 // pred_check
          %p226 = pneg %p35
        $region26: #{_iso_eval_impl.1} parent=23 // pred_check_branch
          %228 = sbr.rel (%p226) target = $region28
        $region27: #{_iso_eval_impl.1} parent=23 // pred_region
          %s229 = sand.u32 %s25, 1
          %s230 = sand.u32 %s25, 1
          %s231 = smul.addr %s230, 16
          %s232 = scalar_lea.vmem [#allocation2], %s231
          %s233 = smul.addr %s15, 8
          %s234 = scalar_lea.vmem %s0, %s233
          // Predicated region
          $region29: #{_iso_eval_impl.1} parent=27 // pred_check
            _
          $region30: #{_iso_eval_impl.1} parent=27 // pred_check_branch
            %236 = sbr.rel (0) target = $region32
          $region31: #{_iso_eval_impl.1} parent=27 // pred_region
            // Predicated region
            $region33: #{_iso_eval_impl.1} parent=31 // pred_check
              _
            $region34: #{_iso_eval_impl.1} parent=31 // pred_check_branch
              %238 = sbr.rel (0) target = $region36
            $region35: #{_iso_eval_impl.1} parent=31 // pred_region
              // Predicated region
              $region48: #{_iso_eval_impl.1} parent=35 // pred_check
                _
              $region49: #{_iso_eval_impl.1} parent=35 // pred_check_branch
                %256 = sbr.rel (0) target = $region51
              $region50: #{_iso_eval_impl.1} parent=35 // pred_region
                loop: start=0, step=1, limit=1
                $region52: #{_iso_eval_impl.1} parent=50 // loop_pre_header
                  _
                $region53: #{_iso_eval_impl.1} parent=50 // loop_header
                  %s258 = sphi 0, %s262
                  %p259 = scmp.ge.s32.totalorder %s258, 1
                  %s263 = sphi %s234, %s234
                  %s264 = sphi %s232, %s232
                $region54: #{_iso_eval_impl.1} parent=50 // loop_header_branch
                  %261 = sbr.rel (%p259) target = $region58
                $region55: #{_iso_eval_impl.1} parent=50 // loop_body
                  %v265 = vld [vmem:[%s263] sm:$0xff]
                  %266 = vst [vmem:[%s264] sm:$0xff] %v265
                  %v267 = vld [vmem:[%s263 + $0x10] sm:$0xff]
                  %268 = vst [vmem:[%s264 + $0x8] sm:$0xff] %v267
                $region56: #{_iso_eval_impl.1} parent=50 // loop_footer
                  %s262 = sadd.s32 1, %s258
                $region57: #{_iso_eval_impl.1} parent=50 // loop_footer_branch
                  %257 = sbr.rel target = $region53
                $region58: #{_iso_eval_impl.1} parent=50 // loop_exit
                  _
              $region51: #{_iso_eval_impl.1} parent=35 // pred_fallthru
                _
              // Predicated region
              $region59: #{_iso_eval_impl.1} parent=35 // pred_check
                _
              $region60: #{_iso_eval_impl.1} parent=35 // pred_check_branch
                %270 = sbr.rel target = $region62
              $region61: #{_iso_eval_impl.1} parent=35 // pred_region
                _
              $region62: #{_iso_eval_impl.1} parent=35 // pred_fallthru
                _
            $region36: #{_iso_eval_impl.1} parent=31 // pred_fallthru
              _
            // Predicated region
            $region37: #{_iso_eval_impl.1} parent=31 // pred_check
              _
            $region38: #{_iso_eval_impl.1} parent=31 // pred_check_branch
              %240 = sbr.rel target = $region40
            $region39: #{_iso_eval_impl.1} parent=31 // pred_region
              %s242 = ssub.s32 256, 1
              loop: start=0, step=1, limit=1
              $region41: #{_iso_eval_impl.1} parent=39 // loop_pre_header
                _
              $region42: #{_iso_eval_impl.1} parent=39 // loop_header
                %s244 = sphi 0, %s248
                %p245 = scmp.ge.s32.totalorder %s244, 1
                %s249 = sphi %s234, %s234
                %s250 = sphi %s232, %s232
              $region43: #{_iso_eval_impl.1} parent=39 // loop_header_branch
                %247 = sbr.rel (%p245) target = $region47
              $region44: #{_iso_eval_impl.1} parent=39 // loop_body
                %v251 = vld [vmem:[%s249] sm:%s242]
                %252 = vst [vmem:[%s250] sm:%s242] %v251
                %v253 = vld [vmem:[%s249 + $0x10] sm:%s242]
                %254 = vst [vmem:[%s250 + $0x8] sm:%s242] %v253
              $region45: #{_iso_eval_impl.1} parent=39 // loop_footer
                %s248 = sadd.s32 1, %s244
              $region46: #{_iso_eval_impl.1} parent=39 // loop_footer_branch
                %243 = sbr.rel target = $region42
              $region47: #{_iso_eval_impl.1} parent=39 // loop_exit
                _
            $region40: #{_iso_eval_impl.1} parent=31 // pred_fallthru
              _
          $region32: #{_iso_eval_impl.1} parent=27 // pred_fallthru
            _
          %271 = vnop
        $region28: #{_iso_eval_impl.1} parent=23 // pred_fallthru
          _
        // Predicated region
        $region63: #{_iso_eval_impl.1} parent=23 // pred_check
          %p272 = pneg %p61
        $region64: #{_iso_eval_impl.1} parent=23 // pred_check_branch
          %274 = sbr.rel (%p272) target = $region66
        $region65: #{_iso_eval_impl.1} parent=23 // pred_region
          %p275 = scmp.lt.s32.totalorder %s15, 1
          %s276 = scalar_select %p275, %s15, 1
          %s277 = scalar_lea.vmem %s1, %s276
        $region66: #{_iso_eval_impl.1} parent=23 // pred_fallthru
          _
      $region24: #{_iso_eval_impl.1} parent=5 // pred_fallthru
        _
      %p278 = scmp.le.s32.totalorder 1, %s15
      %p279 = scmp.lt.s32.totalorder %s15, 3
      %p280 = pnand %p278, %p279
      %p281 = pneg %p280
      // Predicated region
      $region67: #{_iso_eval_impl.1} parent=5 // pred_check
        _
      $region68: #{_iso_eval_impl.1} parent=5 // pred_check_branch
        %283 = sbr.rel (%p280) target = $region70
      $region69: #{_iso_eval_impl.1} parent=5 // pred_region
        %s284 = ssub.s32 %s15, 1
        %s285 = sand.u32 %s28, 1
        %s286 = sand.u32 %s28, 1
        %s287 = smul.addr %s286, 16
        %s288 = scalar_lea.vmem [#allocation2], %s287
        // Predicated region
        $region71: #{_iso_eval_impl.1} parent=69 // pred_check
          %p289 = pneg %p41
        $region72: #{_iso_eval_impl.1} parent=69 // pred_check_branch
          %291 = sbr.rel (%p289) target = $region74
        $region73: #{_iso_eval_impl.1} parent=69 // pred_region
          _
        $region74: #{_iso_eval_impl.1} parent=69 // pred_fallthru
          _
        // Predicated region
        $region75: #{_iso_eval_impl.1} parent=69 // pred_check
          %p292 = pneg %p88
        $region76: #{_iso_eval_impl.1} parent=69 // pred_check_branch
          %294 = sbr.rel (%p292) target = $region78
        $region77: #{_iso_eval_impl.1} parent=69 // pred_region
          %296 = dma.done [#allocation4], 16
        $region78: #{_iso_eval_impl.1} parent=69 // pred_fallthru
          _
        // Predicated region
        $region79: #{_iso_eval_impl.1} parent=69 // pred_check
          %p297 = pneg %p109
        $region80: #{_iso_eval_impl.1} parent=69 // pred_check_branch
          %299 = sbr.rel (%p297) target = $region82
        $region81: #{_iso_eval_impl.1} parent=69 // pred_region
          %301 = dma.done [#allocation6], 16
        $region82: #{_iso_eval_impl.1} parent=69 // pred_fallthru
          _
        %302 = sfence
        %s303 = sand.u32 %s28, 1
        %s304 = sand.u32 %s28, 1
        %s305 = smul.addr %s304, 16
        %s306 = scalar_lea.vmem [#allocation2], %s305
        %p307 = pneg %p41
        %p308 = pneg %p38
        %p309 = scmp.lt.s32.totalorder %s20, 1
        %s310 = scalar_select %p309, %s20, 1
        %s311 = scalar_lea.vmem %s1, %s310
        %p312 = pneg %p67
        %p313 = pneg %p64
        %p314 = pneg %p88
        %p315 = pneg %p85
        %p316 = pneg %p109
        %p317 = pneg %p106
        %p318 = pneg %p135
        %p319 = pneg %p132
        %p320 = scmp.lt.s32.totalorder %s20, 1
        %s321 = scalar_select %p320, %s20, 1
        %s322 = scalar_lea.vmem %s4, %s321
        %p323 = pneg %p161
        %p324 = pneg %p158
        %p325 = scmp.lt.s32.totalorder %s20, 1
        %s326 = scalar_select %p325, %s20, 1
        %s327 = scalar_lea.vmem %s5, %s326
        %p328 = pneg %p187
        %p329 = pneg %p184
        %p330 = scmp.lt.s32.totalorder %s20, 1
        %s331 = scalar_select %p330, %s20, 1
        %s332 = scalar_lea.vmem %s6, %s331
        %p333 = scmp.lt.s32.totalorder %s20, 1
        %s334 = scalar_select %p333, %s20, 1
        %s335 = scalar_lea.vmem %s1, %s334
        %p336 = scmp.lt.s32.totalorder %s20, 1
        %s337 = scalar_select %p336, %s20, 1
        %s338 = scalar_lea.vmem %s4, %s337
        %p339 = scmp.lt.s32.totalorder %s20, 1
        %s340 = scalar_select %p339, %s20, 1
        %s341 = scalar_lea.vmem %s5, %s340
        %p342 = scmp.lt.s32.totalorder %s20, 1
        %s343 = scalar_select %p342, %s20, 1
        %s344 = scalar_lea.vmem %s6, %s343
        %v345 = vld [vmem:[%s288] sm:$0xff]
        %v346 = vld [vmem:[%s288 + $0x8] sm:$0x3]
        %vm347 = vcmask 1041408
        %v348 = vsel %vm347, %v346, -inf
        %v349 = vmax.f32 %v345, %v348
        %v350 = vrot.slane %v349, 4
        %v351 = vmax.f32 %v349, %v350
        %v352 = vrot.slane %v351, 2
        %v353 = vmax.f32 %v351, %v352
        %v354 = vrot.slane %v353, 1
        %v355 = vmax.f32 %v353, %v354
        %v356 = vsub.f32 %v345, %v355
        %v357 = vsub.f32 %v346, %v355
        %v358 = vmul.f32 %v356, 1.442695
        %v359 = vpow.pop %v358
        %v360 = vmul.f32 %v357, 1.442695
        %v361 = vpow.pop %v360
        %v362 = vsel %vm347, %v361, 0.0
        %v363 = vadd.f32 %v359, %v362
        %v364 = vrot.slane %v363, 4
        %v365 = vadd.f32 %v363, %v364
        %v366 = vrot.slane %v365, 2
        %v367 = vadd.f32 %v365, %v366
        %v368 = vrot.slane %v367, 1
        %v369 = vadd.f32 %v367, %v368
        %v370 = vrcp.pop %v369
        %v371 = vmul.f32 %v369, %v370
        %v372 = vsub.f32 1.0, %v371
        %v373 = vmul.f32 %v370, %v372
        %v374 = vadd.f32 %v370, %v373
        %vm375 = vweird.f32 %v369
        %vm376 = vweird.f32 %v370
        %vm377 = vmor %vm375, %vm376
        %v378 = vsel %vm377, %v370, %v374
        %v379 = vand.u32 2147483647, %v369
        %vm380 = vcmp.eq.f32.partialorder %v379, 8.507059e+37
        %v381 = vand.u32 %v369, 2147483648
        %v382 = vor.u32 1.1754944e-38, %v381
        %v383 = vsel %vm380, %v382, %v378
        %v384 = vmul.f32 1.0, %v383
        %v385 = vlaneseq
        %v386 = vshrl.u32 %v385, 7
        %v387 = vadd.s32 %v386, 8
        %vm388 = vcmp.eq.f32.partialorder %v345, %v355
        %vm389 = vcmp.eq.f32.partialorder %v346, %v355
        %v390 = vsel %vm388, %v386, 10
        %v391 = vsel %vm389, %v387, 10
        %v392 = vsel %vm347, %v391, 2147483647
        %vm393 = vcmp.lt.s32.totalorder %v390, %v392
        %v394 = vsel %vm393, %v390, %v392
        %v395 = vrot.slane %v394, 4
        %vm396 = vcmp.lt.s32.totalorder %v394, %v395
        %v397 = vsel %vm396, %v394, %v395
        %v398 = vrot.slane %v397, 2
        %vm399 = vcmp.lt.s32.totalorder %v397, %v398
        %v400 = vsel %vm399, %v397, %v398
        %v401 = vrot.slane %v400, 1
        %vm402 = vcmp.lt.s32.totalorder %v400, %v401
        %v403 = vsel %vm402, %v400, %v401
        %404 = vst [vmem:[%s338] sm:$0x1] %v384
        %v405 = vld [vmem:[%s335] sm:$0x1]
        %vm406 = vcmp.eq.s32.totalorder %v403, %v405
        %v407 = vsel %vm406, 1, 0
        %408 = vst [vmem:[%s344] sm:$0x1] %v407
        %s409 = sld [smem:[#allocation3]]
        %s410 = sld [smem:[#allocation3 + $0xf]]
        %v411 = vstv %s409
        %v412 = vmax.f32 %v411, %v384
        %v413 = vstv %s410
        %v414 = vmin.f32 %v413, %v412
        %s415 = sld [smem:[#allocation3 + $0x1]]
        %v416 = vstv %s415
        %s417 = sld [smem:[#allocation5]]
        %v418 = vstv %s417
        %s419 = sld [smem:[#allocation5 + $0x1]]
        %v420 = vstv %s419
        %vm421 = vcmp.ge.f32.partialorder %v414, %v416
        %v422 = vsel %vm421, %v416, %v411
        %s423 = sld [smem:[#allocation3 + $0x2]]
        %v424 = vstv %s423
        %v425 = vsel %vm421, %v424, %v416
        %v426 = vsel %vm421, %v420, %v418
        %s427 = sld [smem:[#allocation5 + $0x2]]
        %v428 = vstv %s427
        %v429 = vsel %vm421, %v428, %v420
        %vm430 = vcmp.ge.f32.partialorder %v414, %v424
        %v431 = vsel %vm430, %v424, %v422
        %s432 = sld [smem:[#allocation3 + $0x3]]
        %v433 = vstv %s432
        %v434 = vsel %vm430, %v433, %v425
        %v435 = vsel %vm430, %v428, %v426
        %s436 = sld [smem:[#allocation5 + $0x3]]
        %v437 = vstv %s436
        %v438 = vsel %vm430, %v437, %v429
        %vm439 = vcmp.ge.f32.partialorder %v414, %v433
        %v440 = vsel %vm439, %v433, %v431
        %s441 = sld [smem:[#allocation3 + $0x4]]
        %v442 = vstv %s441
        %v443 = vsel %vm439, %v442, %v434
        %v444 = vsel %vm439, %v437, %v435
        %s445 = sld [smem:[#allocation5 + $0x4]]
        %v446 = vstv %s445
        %v447 = vsel %vm439, %v446, %v438
        %vm448 = vcmp.ge.f32.partialorder %v414, %v442
        %v449 = vsel %vm448, %v442, %v440
        %s450 = sld [smem:[#allocation3 + $0x5]]
        %v451 = vstv %s450
        %v452 = vsel %vm448, %v451, %v443
        %v453 = vsel %vm448, %v446, %v444
        %s454 = sld [smem:[#allocation5 + $0x5]]
        %v455 = vstv %s454
        %v456 = vsel %vm448, %v455, %v447
        %vm457 = vcmp.ge.f32.partialorder %v414, %v451
        %v458 = vsel %vm457, %v451, %v449
        %s459 = sld [smem:[#allocation3 + $0x6]]
        %v460 = vstv %s459
        %v461 = vsel %vm457, %v460, %v452
        %v462 = vsel %vm457, %v455, %v453
        %s463 = sld [smem:[#allocation5 + $0x6]]
        %v464 = vstv %s463
        %v465 = vsel %vm457, %v464, %v456
        %vm466 = vcmp.ge.f32.partialorder %v414, %v460
        %v467 = vsel %vm466, %v460, %v458
        %s468 = sld [smem:[#allocation3 + $0x7]]
        %v469 = vstv %s468
        %v470 = vsel %vm466, %v469, %v461
        %v471 = vsel %vm466, %v464, %v462
        %s472 = sld [smem:[#allocation5 + $0x7]]
        %v473 = vstv %s472
        %v474 = vsel %vm466, %v473, %v465
        %vm475 = vcmp.ge.f32.partialorder %v414, %v469
        %v476 = vsel %vm475, %v469, %v467
        %s477 = sld [smem:[#allocation3 + $0x8]]
        %v478 = vstv %s477
        %v479 = vsel %vm475, %v478, %v470
        %v480 = vsel %vm475, %v473, %v471
        %s481 = sld [smem:[#allocation5 + $0x8]]
        %v482 = vstv %s481
        %v483 = vsel %vm475, %v482, %v474
        %vm484 = vcmp.ge.f32.partialorder %v414, %v478
        %v485 = vsel %vm484, %v478, %v476
        %s486 = sld [smem:[#allocation3 + $0x9]]
        %v487 = vstv %s486
        %v488 = vsel %vm484, %v487, %v479
        %v489 = vsel %vm484, %v482, %v480
        %s490 = sld [smem:[#allocation5 + $0x9]]
        %v491 = vstv %s490
        %v492 = vsel %vm484, %v491, %v483
        %vm493 = vcmp.ge.f32.partialorder %v414, %v487
        %v494 = vsel %vm493, %v487, %v485
        %s495 = sld [smem:[#allocation3 + $0xa]]
        %v496 = vstv %s495
        %v497 = vsel %vm493, %v496, %v488
        %v498 = vsel %vm493, %v491, %v489
        %s499 = sld [smem:[#allocation5 + $0xa]]
        %v500 = vstv %s499
        %v501 = vsel %vm493, %v500, %v492
        %vm502 = vcmp.ge.f32.partialorder %v414, %v496
        %v503 = vsel %vm502, %v496, %v494
        %s504 = sld [smem:[#allocation3 + $0xb]]
        %v505 = vstv %s504
        %v506 = vsel %vm502, %v505, %v497
        %v507 = vsel %vm502, %v500, %v498
        %s508 = sld [smem:[#allocation5 + $0xb]]
        %v509 = vstv %s508
        %v510 = vsel %vm502, %v509, %v501
        %vm511 = vcmp.ge.f32.partialorder %v414, %v505
        %v512 = vsel %vm511, %v505, %v503
        %s513 = sld [smem:[#allocation3 + $0xc]]
        %v514 = vstv %s513
        %v515 = vsel %vm511, %v514, %v506
        %v516 = vsel %vm511, %v509, %v507
        %s517 = sld [smem:[#allocation5 + $0xc]]
        %v518 = vstv %s517
        %v519 = vsel %vm511, %v518, %v510
        %vm520 = vcmp.ge.f32.partialorder %v414, %v514
        %v521 = vsel %vm520, %v514, %v512
        %s522 = sld [smem:[#allocation3 + $0xd]]
        %v523 = vstv %s522
        %v524 = vsel %vm520, %v523, %v515
        %v525 = vsel %vm520, %v518, %v516
        %s526 = sld [smem:[#allocation5 + $0xd]]
        %v527 = vstv %s526
        %v528 = vsel %vm520, %v527, %v519
        %vm529 = vcmp.ge.f32.partialorder %v414, %v523
        %v530 = vsel %vm529, %v523, %v521
        %s531 = sld [smem:[#allocation3 + $0xe]]
        %v532 = vstv %s531
        %v533 = vsel %vm529, %v532, %v524
        %v534 = vsel %vm529, %v527, %v525
        %s535 = sld [smem:[#allocation5 + $0xe]]
        %v536 = vstv %s535
        %v537 = vsel %vm529, %v536, %v528
        %vm538 = vcmp.ge.f32.partialorder %v414, %v532
        %v539 = vsel %vm538, %v532, %v530
        %v540 = vsel %vm538, %v413, %v533
        %v541 = vsel %vm538, %v536, %v534
        %s542 = sld [smem:[#allocation5 + $0xf]]
        %v543 = vstv %s542
        %v544 = vsel %vm538, %v543, %v537
        %v545 = vsub.f32 %v540, %v539
        %v546 = vsub.f32 %v414, %v539
        %v547 = vmax.f32 %v545, 1e-12
        %v548 = vrcp.pop %v547
        %v549 = vmul.f32 %v547, %v548
        %v550 = vsub.f32 1.0, %v549
        %v551 = vmul.f32 %v548, %v550
        %v552 = vadd.f32 %v548, %v551
        %vm553 = vweird.f32 %v547
        %vm554 = vweird.f32 %v548
        %vm555 = vmor %vm553, %vm554
        %v556 = vsel %vm555, %v548, %v552
        %v557 = vand.u32 2147483647, %v547
        %vm558 = vcmp.eq.f32.partialorder %v557, 8.507059e+37
        %v559 = vand.u32 %v547, 2147483648
        %v560 = vor.u32 1.1754944e-38, %v559
        %v561 = vsel %vm558, %v560, %v556
        %v562 = vmul.f32 %v546, %v561
        %v563 = vmax.f32 %v562, 0.0
        %v564 = vmin.f32 %v563, 1.0
        %v565 = vsub.f32 %v544, %v541
        %v566 = vmul.f32 %v564, %v565
        %v567 = vadd.f32 %v541, %v566
        %568 = vst [vmem:[%s341] sm:$0x1] %v567
        %p569 = scmp.lt.s32.totalorder %s20, 1
        %s570 = scalar_select %p569, %s20, 1
        %s571 = scalar_lea.vmem %s4, %s570
        %p572 = scmp.lt.s32.totalorder %s20, 1
        %s573 = scalar_select %p572, %s20, 1
        %s574 = scalar_lea.vmem %s5, %s573
        %p575 = scmp.lt.s32.totalorder %s20, 1
        %s576 = scalar_select %p575, %s20, 1
        %s577 = scalar_lea.vmem %s6, %s576
        // Predicated region
        $region83: #{_iso_eval_impl.1} parent=69 // pred_check
          %p578 = pneg %p132
        $region84: #{_iso_eval_impl.1} parent=69 // pred_check_branch
          %580 = sbr.rel (%p578) target = $region86
        $region85: #{_iso_eval_impl.1} parent=69 // pred_region
          _
        $region86: #{_iso_eval_impl.1} parent=69 // pred_fallthru
          _
        // Predicated region
        $region87: #{_iso_eval_impl.1} parent=69 // pred_check
          %p581 = pneg %p158
        $region88: #{_iso_eval_impl.1} parent=69 // pred_check_branch
          %583 = sbr.rel (%p581) target = $region90
        $region89: #{_iso_eval_impl.1} parent=69 // pred_region
          _
        $region90: #{_iso_eval_impl.1} parent=69 // pred_fallthru
          _
        // Predicated region
        $region91: #{_iso_eval_impl.1} parent=69 // pred_check
          %p584 = pneg %p184
        $region92: #{_iso_eval_impl.1} parent=69 // pred_check_branch
          %586 = sbr.rel (%p584) target = $region94
        $region93: #{_iso_eval_impl.1} parent=69 // pred_region
          _
        $region94: #{_iso_eval_impl.1} parent=69 // pred_fallthru
          _
      $region70: #{_iso_eval_impl.1} parent=5 // pred_fallthru
        _
      %p587 = scmp.le.s32.totalorder 2, %s15
      // Predicated region
      $region95: #{_iso_eval_impl.1} parent=5 // pred_check
        %p588 = pneg %p587
      $region96: #{_iso_eval_impl.1} parent=5 // pred_check_branch
        %590 = sbr.rel (%p588) target = $region98
      $region97: #{_iso_eval_impl.1} parent=5 // pred_region
        %s591 = ssub.s32 %s15, 2
        // Predicated region
        $region99: #{_iso_eval_impl.1} parent=97 // pred_check
          %p592 = pneg %p138
        $region100: #{_iso_eval_impl.1} parent=97 // pred_check_branch
          %594 = sbr.rel (%p592) target = $region102
        $region101: #{_iso_eval_impl.1} parent=97 // pred_region
          %p595 = scmp.lt.s32.totalorder %s21, 1
          %s596 = scalar_select %p595, %s21, 1
          %s597 = scalar_lea.vmem %s4, %s596
        $region102: #{_iso_eval_impl.1} parent=97 // pred_fallthru
          _
        // Predicated region
        $region103: #{_iso_eval_impl.1} parent=97 // pred_check
          %p598 = pneg %p164
        $region104: #{_iso_eval_impl.1} parent=97 // pred_check_branch
          %600 = sbr.rel (%p598) target = $region106
        $region105: #{_iso_eval_impl.1} parent=97 // pred_region
          %p601 = scmp.lt.s32.totalorder %s21, 1
          %s602 = scalar_select %p601, %s21, 1
          %s603 = scalar_lea.vmem %s5, %s602
        $region106: #{_iso_eval_impl.1} parent=97 // pred_fallthru
          _
        // Predicated region
        $region107: #{_iso_eval_impl.1} parent=97 // pred_check
          %p604 = pneg %p190
        $region108: #{_iso_eval_impl.1} parent=97 // pred_check_branch
          %606 = sbr.rel (%p604) target = $region110
        $region109: #{_iso_eval_impl.1} parent=97 // pred_region
          %p607 = scmp.lt.s32.totalorder %s21, 1
          %s608 = scalar_select %p607, %s21, 1
          %s609 = scalar_lea.vmem %s6, %s608
        $region110: #{_iso_eval_impl.1} parent=97 // pred_fallthru
          _
      $region98: #{_iso_eval_impl.1} parent=5 // pred_fallthru
        _
    $region6: #{_iso_eval_impl.1} parent=1 // loop_footer
      %s19 = sadd.s32 1, %s15
    $region7: #{_iso_eval_impl.1} parent=1 // loop_footer_branch
      %14 = sbr.rel target = $region3
    $region8: #{_iso_eval_impl.1} parent=1 // loop_exit
      _
    %610 = vsyncpa [#allocation4], 1
    %s611 = scalar_lea.sflag [#allocation4], 1
    %612 = vsyncpa %s611, 1
    %613 = vsyncpa [#allocation6], 1

</llo_original>
